<compile_context>
chip_gen: v7x
topology: tpu7x:2x2x1
jax: 0.10.0
libtpu: 0.0.40
codegen_flags: <defaults>
</compile_context>

<pallas_src>
import jax
import jax.numpy as jnp
from jax.experimental import pallas as pl
from jax.experimental.pallas import tpu as pltpu

_LANE = 128
_TARGET_BLOCK_BYTES = 2 * 1024 * 1024  # ~2 MiB per buffer (x4 with in+out, 2-deep)


def _droppath_kernel(mask_ref, x_ref, o_ref):
    # mask_ref : VMEM (tb, 1)  float32 -- per-sample keep mask, pre-scaled by 1/keep_prob
    # x_ref    : VMEM (tb, tl) native dtype
    # o_ref    : VMEM (tb, tl) native dtype
    o_ref[...] = x_ref[...] * mask_ref[...].astype(x_ref.dtype)


def _choose_tiles(B, N, itemsize):
    """Pick layout-legal (tb, tl) block dims of ~_TARGET_BLOCK_BYTES per buffer.

    Legality: tb is a multiple of the sublane minimum or equals B;
              tl is a multiple of 128 or equals N.
    """
    sub = {4: 8, 2: 16, 1: 32}.get(itemsize, 8)
    row_bytes = N * itemsize

    if row_bytes >= _TARGET_BLOCK_BYTES and N >= _LANE:
        # Large samples: small sublane-aligned batch chunk, tile the feature axis.
        tb = B if B < sub else sub
        tl = (_TARGET_BLOCK_BYTES // (tb * itemsize)) // _LANE * _LANE
        tl = max(_LANE, min(tl, (N // _LANE) * _LANE))
    else:
        # Small samples: whole feature row per block, batch samples per step.
        tl = N
        rows = max(1, _TARGET_BLOCK_BYTES // max(1, row_bytes))
        if rows >= B:
            tb = B
        else:
            tb = min(B, max(sub, (rows // sub) * sub))
    return tb, tl


def _droppath_pallas(x2d, mask2d):
    """x2d: (B, N) in x's native dtype; mask2d: (B, 1) float32."""
    B, N = x2d.shape
    tb, tl = _choose_tiles(B, N, x2d.dtype.itemsize)
    grid = (pl.cdiv(B, tb), pl.cdiv(N, tl))
    return pl.pallas_call(
        _droppath_kernel,
        out_shape=jax.ShapeDtypeStruct((B, N), x2d.dtype),
        grid_spec=pltpu.PrefetchScalarGridSpec(
            num_scalar_prefetch=0,
            grid=grid,
            in_specs=[
                pl.BlockSpec((tb, 1), lambda i, j: (i, 0)),   # mask
                pl.BlockSpec((tb, tl), lambda i, j: (i, j)),  # x
            ],
            out_specs=pl.BlockSpec((tb, tl), lambda i, j: (i, j)),
        ),
        compiler_params=pltpu.CompilerParams(
            dimension_semantics=("parallel", "parallel"),
        ),
    )(mask2d, x2d)


class DropPath:
    """JAX/Pallas re-implementation of timm-style DropPath (forward only)."""

    def __init__(self, drop_prob: float = 0.0, scale_by_keep: bool = True):
        self.drop_prob = float(drop_prob)
        self.scale_by_keep = scale_by_keep
        self.training = True

    def __call__(self, x, *, rng):
        if self.drop_prob == 0.0 or not self.training:
            return x

        keep_prob = 1.0 - self.drop_prob
        B = x.shape[0]

        # Per-sample Bernoulli mask (B scalars of glue), scaled exactly like
        # the PyTorch module's random_tensor.div_(keep_prob).  Kept in f32;
        # it is cast to x's dtype inside the kernel so the hot multiply and
        # all HBM traffic stay in the tensor's native dtype.
        bern = jax.random.bernoulli(rng, keep_prob, (B,)).astype(jnp.float32)
        if keep_prob > 0.0 and self.scale_by_keep:
            mask = bern / keep_prob
        else:
            mask = bern
        mask = mask.reshape(B, 1)

        orig_shape = x.shape
        x2d = x.reshape(B, -1)                 # view; no dtype cast, no padding
        out = _droppath_pallas(x2d, mask)
        return out.reshape(orig_shape)


if __name__ == "__main__":
    key = jax.random.PRNGKey(0)
    kx, kmask = jax.random.split(key)

    B, C, H, W = 2, 4, 16, 16  # NCHW, matching the PyTorch convention
    x = jax.random.normal(kx, (B, C, H, W), dtype=jnp.float32)

    module = DropPath(drop_prob=0.25, scale_by_keep=True)
    module.training = True

    y = jax.block_until_ready(module(x, rng=kmask))

    # Reference check (pure JAX) with the identical mask draw.
    keep_prob = 1.0 - module.drop_prob
    bern = jax.random.bernoulli(kmask, keep_prob, (B,)).astype(jnp.float32)
    mask_ref = bern / keep_prob
    y_ref = x * mask_ref.reshape(B, 1, 1, 1)
    assert y.shape == x.shape and y.dtype == x.dtype
    assert jnp.allclose(y, y_ref, atol=1e-6, rtol=1e-6)

    # Eval-mode path (identity).
    module.training = False
    y_eval = jax.block_until_ready(module(x, rng=kmask))
    assert jnp.array_equal(y_eval, x)

    # bf16 path exercises the native-dtype (no upcast) kernel.
    module.training = True
    xb = x.astype(jnp.bfloat16)
    yb = jax.block_until_ready(module(xb, rng=kmask))
    yb_ref = xb * mask_ref.reshape(B, 1, 1, 1).astype(jnp.bfloat16)
    assert yb.shape == xb.shape and yb.dtype == jnp.bfloat16
    assert jnp.allclose(yb.astype(jnp.float32), yb_ref.astype(jnp.float32),
                        atol=1e-2, rtol=1e-2)

    print("KERNEL_OK")
</pallas_src>

<mosaic_0001>
module attributes {stable_mosaic.version = 11 : i64} {
  func.func @_droppath_kernel(%arg0: i32, %arg1: i32, %arg2: memref<2x1xf32, #tpu.memory_space<vmem>>, %arg3: memref<2x1024xf32, #tpu.memory_space<vmem>>, %arg4: memref<2x1024xf32, #tpu.memory_space<vmem>>) attributes {dimension_semantics = [#tpu.dimension_semantics<parallel>, #tpu.dimension_semantics<parallel>], iteration_bounds = array<i64: 1, 1>, scalar_prefetch = 0 : i64, scratch_operands = 0 : i64, tpu.core_type = #tpu.core_type<tc>, window_params = [{transform_indices = @transform_0, window_bounds = array<i64: 2, 1>}, {transform_indices = @transform_1, window_bounds = array<i64: 2, 1024>}, {transform_indices = @transform_2, window_bounds = array<i64: 2, 1024>}]} {
    %c0 = arith.constant 0 : index
    %c0_0 = arith.constant 0 : index
    %0 = vector.load %arg3[%c0, %c0_0] : memref<2x1024xf32, #tpu.memory_space<vmem>>, vector<2x1024xf32>
    %c0_1 = arith.constant 0 : index
    %c0_2 = arith.constant 0 : index
    %1 = vector.load %arg2[%c0_1, %c0_2] : memref<2x1xf32, #tpu.memory_space<vmem>>, vector<2x1xf32>
    %2 = vector.broadcast %1 : vector<2x1xf32> to vector<2x1024xf32>
    %3 = arith.mulf %0, %2 : vector<2x1024xf32>
    %c0_3 = arith.constant 0 : index
    %c0_4 = arith.constant 0 : index
    %4 = vector.load %arg4[%c0_3, %c0_4] : memref<2x1024xf32, #tpu.memory_space<vmem>>, vector<2x1024xf32>
    tpu.vector_store %arg4[%c0_3, %c0_4], %3 {strides = array<i32>} : memref<2x1024xf32, #tpu.memory_space<vmem>>, vector<2x1024xf32>,
    return
  }
  func.func @transform_0(%arg0: i32, %arg1: i32) -> (i32, i32) {
    %c0_i32 = arith.constant 0 : i32
    %c0_i32_0 = arith.constant 0 : i32
    return %arg0, %c0_i32 : i32, i32
  }
  func.func @transform_1(%arg0: i32, %arg1: i32) -> (i32, i32) {
    %c0_i32 = arith.constant 0 : i32
    return %arg0, %arg1 : i32, i32
  }
  func.func @transform_2(%arg0: i32, %arg1: i32) -> (i32, i32) {
    %c0_i32 = arith.constant 0 : i32
    return %arg0, %arg1 : i32, i32
  }
}

</mosaic_0001>

<llo_original>
// kernel: tpu_custom_call.1
$region0: #{tpu_custom_call.1}
  #allocation0 [shape = 'u32[]', space=smem, size = 0x4, offset = 0x4, fixed_abs, tag = 'smem constant byte address 0x4 - core index']
  #allocation1 [shape = 'u32[144,128]{1,0:T(1,128)}', space=vmem, size = 0x12000, scoped, tag = 'internal scratch']
  %s0 = inlined_call_operand.vmem [shape: f32[2,1], index: 0, kind: input, shape index: {}]
  %s1 = inlined_call_operand.hbm [shape: f32[2,1024], index: 1, kind: input, shape index: {}]
  %s2 = inlined_call_operand.hbm [shape: f32[2,1024], index: 2, kind: output, shape index: {}]
  %s3 = sld [smem:[#allocation0]]
  $region22: #{tpu_custom_call.1} parent=0
    _
  %s5 = ssub.s32 1, %s3
  %s6 = scalar_select 0, %s5, %s3
  $region1: #{tpu_custom_call.1} parent=0
    #allocation2 [shape = 'u8[8192]{0}', space=vmem, size = 0x2000, scoped, tag = 'input window, operand 1, single buffered']
    #allocation3 [shape = 's32[1]{0}', space=sflag, size = 0x4, scoped, tag = 'scoped memory for tpu_custom_call.1']
    #allocation4 [shape = 's32[1]{0}', space=sflag, size = 0x4, scoped, tag = 'scoped memory for tpu_custom_call.1']
    #allocation5 [shape = 'u8[8192]{0}', space=vmem, size = 0x2000, scoped, tag = 'output window, operand 0, single buffered']
    %7 = vsyncpa [#allocation3], 0
    %8 = vsyncpa [#allocation4], 0
    // Predicated region
    $region2: #{tpu_custom_call.1} parent=1 // pred_check
      _
    $region3: #{tpu_custom_call.1} parent=1 // pred_check_branch
      %10 = sbr.rel (0) target = $region5
    $region4: #{tpu_custom_call.1} parent=1 // pred_region
      _
    $region5: #{tpu_custom_call.1} parent=1 // pred_fallthru
      _
    // Predicated region
    $region6: #{tpu_custom_call.1} parent=1 // pred_check
      _
    $region7: #{tpu_custom_call.1} parent=1 // pred_check_branch
      %12 = sbr.rel (0) target = $region9
    $region8: #{tpu_custom_call.1} parent=1 // pred_region
      %s14 = ssub.s32 256, 256
      %15 = vsyncadd [#allocation3], %s14
      %s17 = sshll.u32 [#allocation2], 4
      %s18 = int_to_ptr.vmem [resolvable:$true] %s17
      %20 = dma.hbm_to_vmem [thread:$0]  %s1, 256, %s18, [#allocation3]
    $region9: #{tpu_custom_call.1} parent=1 // pred_fallthru
      _
    // Predicated region
    $region10: #{tpu_custom_call.1} parent=1 // pred_check
      _
    $region11: #{tpu_custom_call.1} parent=1 // pred_check_branch
      %22 = sbr.rel (0) target = $region13
    $region12: #{tpu_custom_call.1} parent=1 // pred_region
      %23 = dma.done [#allocation3], 256
    $region13: #{tpu_custom_call.1} parent=1 // pred_fallthru
      _
    %v24 = vld [vmem:[#allocation2] sm:$0xff]
    %v25 = vld [vmem:[#allocation2 + $0x8] sm:$0xff]
    %v26 = vld [vmem:[%s0] sm:$0x3]
    %28 = vset.pattern.permute.xlu0 0
    %29 = vperm.xlu0 %28, %v26
    %v30 = vpop.permute.xlu0 %29
    %v32 = vunpack.c.l.s4 269488144
    %v33 = vunpack.c.0.s8 %v32
    %v34 = vlaneseq
    %v35 = vshrl.u32 %v34, 7
    %v36 = vsub.s32 %v33, %v35
    %v37 = vrot.slane %v30, %v36
    %v39 = vmul.f32 %v24, %v37
    %v40 = vmul.f32 %v25, %v37
    %41 = vst [vmem:[#allocation5] sm:$0xff] %v39
    %42 = vst [vmem:[#allocation5 + $0x8] sm:$0xff] %v40
    // Predicated region
    $region14: #{tpu_custom_call.1} parent=1 // pred_check
      _
    $region15: #{tpu_custom_call.1} parent=1 // pred_check_branch
      %44 = sbr.rel (0) target = $region17
    $region16: #{tpu_custom_call.1} parent=1 // pred_region
      %s46 = ssub.s32 256, 256
      %47 = vsyncadd [#allocation4], %s46
      %s49 = sshll.u32 [#allocation5], 4
      %s50 = int_to_ptr.vmem [resolvable:$true] %s49
      %52 = dma.vmem_to_hbm [thread:$0]  %s50, 256, %s2, [#allocation4]
    $region17: #{tpu_custom_call.1} parent=1 // pred_fallthru
      _
    // Predicated region
    $region18: #{tpu_custom_call.1} parent=1 // pred_check
      _
    $region19: #{tpu_custom_call.1} parent=1 // pred_check_branch
      %54 = sbr.rel (0) target = $region21
    $region20: #{tpu_custom_call.1} parent=1 // pred_region
      %55 = dma.done [#allocation4], 256
    $region21: #{tpu_custom_call.1} parent=1 // pred_fallthru
      _
    %56 = vsyncpa [#allocation3], 1
    %57 = vsyncpa [#allocation4], 1

</llo_original>
